<compile_context>
chip_gen: v5e
topology: v5e:2x2
jax: 0.10.0
libtpu: 0.0.40
codegen_flags: <defaults>
</compile_context>

<pallas_src>
import functools

import jax
import jax.numpy as jnp
from jax.experimental import pallas as pl
from jax.experimental.pallas import tpu as pltpu


# VMEM budgets (conservative for v7x: 64 MiB physical / 32 MiB default scoped;
# also valid on v5e/v6e which have more VMEM).
_VMEM_LIMIT_BYTES = 32 * 1024 * 1024
_BLOCK_BUDGET_BYTES = 24 * 1024 * 1024  # ~ (in + out) blocks, double-buffered


def _excite(pooled_col, w1t_ref, w2_ref):
    """FC -> ReLU -> FC -> Sigmoid on a (C, 1) pooled column.

    w1t_ref holds W1.T (shape (C, C//r)); w2_ref holds W2 (shape (C, C//r)).
    Broadcast-multiply + reduce keeps everything in the (C, 1) column layout
    so the gate broadcasts over the spatial lanes with no relayout.
    """
    w1t = w1t_ref[...].astype(jnp.float32)                  # (C, Cr)
    w2 = w2_ref[...].astype(jnp.float32)                    # (C, Cr)
    h = jnp.sum(w1t * pooled_col, axis=0, keepdims=True)    # (1, Cr) == (W1 @ pooled)^T
    h = jnp.maximum(h, 0.0)                                 # ReLU
    z = jnp.sum(w2 * h, axis=1, keepdims=True)              # (C, 1)  == W2 @ h
    return jax.nn.sigmoid(z)                                # (C, 1) f32


def _fused_se_kernel(x_ref, w1t_ref, w2_ref, o_ref, *, inv_hw):
    """One batch per grid step: pool -> excite -> scale on a (1, C, HW) block."""
    # Squeeze: spatial sum (f32 accumulation), divide once.
    pooled = jnp.sum(x_ref[0].astype(jnp.float32), axis=-1, keepdims=True) * inv_hw  # (C, 1)
    gate = _excite(pooled, w1t_ref, w2_ref)                                          # (C, 1)
    # Scale: re-read x (don't keep the slab live across the excitation); one
    # multiply + one cast per element, in the input dtype.
    o_ref[...] = (x_ref[...] * gate[None].astype(x_ref.dtype)).astype(o_ref.dtype)


def _pool_excite_kernel(x_ref, w1t_ref, w2_ref, gate_ref, acc_ref, *, inv_hw):
    """Pass 1 of the tiled path: accumulate spatial sums over HW tiles, then run
    the tiny excitation once per batch and emit a (1, C, 1) gate column."""
    hw = pl.program_id(1)

    @pl.when(hw == 0)
    def _init():
        acc_ref[...] = jnp.zeros_like(acc_ref)

    # Partial spatial sum for this HW tile: (C, t_hw) -> (C, 1), f32 accumulate.
    acc_ref[...] += jnp.sum(x_ref[0].astype(jnp.float32), axis=-1, keepdims=True)

    @pl.when(hw == pl.num_programs(1) - 1)
    def _finalize():
        pooled = acc_ref[...] * inv_hw                       # divide once at the end
        gate = _excite(pooled, w1t_ref, w2_ref)              # (C, 1)
        gate_ref[...] = gate[None].astype(gate_ref.dtype)    # (1, C, 1)


def _scale_kernel(gate_ref, x_ref, o_ref):
    """Pass 2 of the tiled path: broadcast the channel gate over lane-dense HW tiles."""
    o_ref[...] = (x_ref[...] * gate_ref[...].astype(x_ref.dtype)).astype(o_ref.dtype)


def _pick_hw_tile(hw, c, itemsize, budget_bytes):
    """Largest multiple-of-128 divisor of `hw` whose (in + out, double-buffered)
    footprint fits the budget; falls back to the full extent (always legal)."""
    best = None
    for t in range(128, hw + 1, 128):
        if hw % t == 0 and 4 * c * t * itemsize <= budget_bytes:
            best = t
    return best if best is not None else hw


def se_layer(x, w1, w2, *, force_two_pass=False, hw_tile=None):
    """SELayer forward.

    x: (B, C, H, W); w1: (C//r, C); w2: (C, C//r) (PyTorch nn.Linear convention).
    """
    B, C, H, W = x.shape
    Cr = w1.shape[0]
    assert w1.shape == (Cr, C) and w2.shape == (C, Cr)
    HW = H * W
    x3 = x.reshape(B, C, HW)
    w1t = w1.T  # (C, Cr): pre-transpose once on the XLA side (free), no in-kernel .T

    itemsize = jnp.dtype(x.dtype).itemsize
    fused_block_bytes = 4 * C * HW * itemsize  # in + out blocks, double-buffered
    use_fused = (not force_two_pass) and fused_block_bytes <= _BLOCK_BUDGET_BYTES

    if use_fused:
        out3 = pl.pallas_call(
            functools.partial(_fused_se_kernel, inv_hw=1.0 / HW),
            out_shape=jax.ShapeDtypeStruct((B, C, HW), x.dtype),
            grid_spec=pltpu.PrefetchScalarGridSpec(
                num_scalar_prefetch=0,
                grid=(B,),
                in_specs=[
                    pl.BlockSpec((1, C, HW), lambda b: (b, 0, 0)),
                    pl.BlockSpec(w1t.shape, lambda b: (0, 0)),
                    pl.BlockSpec(w2.shape, lambda b: (0, 0)),
                ],
                out_specs=pl.BlockSpec((1, C, HW), lambda b: (b, 0, 0)),
            ),
            compiler_params=pltpu.CompilerParams(
                dimension_semantics=("parallel",),
                vmem_limit_bytes=_VMEM_LIMIT_BYTES,
            ),
        )(x3, w1t, w2)
        return out3.reshape(B, C, H, W)

    # --- Two-pass fallback: tiled pooling + tiled scale (large C*HW slabs). ---
    t_hw = hw_tile if hw_tile is not None else _pick_hw_tile(
        HW, C, itemsize, _BLOCK_BUDGET_BYTES)
    assert HW % t_hw == 0, "HW tile must divide HW exactly"
    n_hw = HW // t_hw

    gates = pl.pallas_call(
        functools.partial(_pool_excite_kernel, inv_hw=1.0 / HW),
        out_shape=jax.ShapeDtypeStruct((B, C, 1), jnp.float32),
        grid_spec=pltpu.PrefetchScalarGridSpec(
            num_scalar_prefetch=0,
            grid=(B, n_hw),
            in_specs=[
                pl.BlockSpec((1, C, t_hw), lambda b, h: (b, 0, h)),
                pl.BlockSpec(w1t.shape, lambda b, h: (0, 0)),
                pl.BlockSpec(w2.shape, lambda b, h: (0, 0)),
            ],
            out_specs=pl.BlockSpec((1, C, 1), lambda b, h: (b, 0, 0)),
            scratch_shapes=[pltpu.VMEM((C, 1), jnp.float32)],
        ),
        compiler_params=pltpu.CompilerParams(
            dimension_semantics=("parallel", "arbitrary"),
            vmem_limit_bytes=_VMEM_LIMIT_BYTES,
        ),
    )(x3, w1t, w2)

    out3 = pl.pallas_call(
        _scale_kernel,
        out_shape=jax.ShapeDtypeStruct((B, C, HW), x.dtype),
        grid_spec=pltpu.PrefetchScalarGridSpec(
            num_scalar_prefetch=0,
            grid=(B, n_hw),
            in_specs=[
                pl.BlockSpec((1, C, 1), lambda b, h: (b, 0, 0)),
                pl.BlockSpec((1, C, t_hw), lambda b, h: (b, 0, h)),
            ],
            out_specs=pl.BlockSpec((1, C, t_hw), lambda b, h: (b, 0, h)),
        ),
        compiler_params=pltpu.CompilerParams(
            dimension_semantics=("parallel", "parallel"),
            vmem_limit_bytes=_VMEM_LIMIT_BYTES,
        ),
    )(gates, x3)
    return out3.reshape(B, C, H, W)


def reference(x, w1, w2):
    pooled = jnp.mean(x, axis=(2, 3))                    # (B, C)
    h = jnp.maximum(pooled @ w1.T, 0.0)
    y = jax.nn.sigmoid(h @ w2.T)
    return x * y[:, :, None, None]


if __name__ == "__main__":
    # Shapes consistent with the module: channel=32, reduction=16 -> hidden=2.
    B, C, H, W = 2, 32, 16, 16
    reduction = 16
    Cr = C // reduction

    key = jax.random.PRNGKey(0)
    kx, k1, k2 = jax.random.split(key, 3)
    x = jax.random.normal(kx, (B, C, H, W), dtype=jnp.float32)
    # nn.Linear(bias=False) weight shapes: (out_features, in_features)
    w1 = jax.random.normal(k1, (Cr, C), dtype=jnp.float32) * (1.0 / jnp.sqrt(C))
    w2 = jax.random.normal(k2, (C, Cr), dtype=jnp.float32) * (1.0 / jnp.sqrt(Cr))

    ref = reference(x, w1, w2)

    # Fused single-pass path (per-batch (1, C, HW) blocks — the common SE case).
    out_fused = se_layer(x, w1, w2)
    jax.block_until_ready(out_fused)
    assert out_fused.shape == (B, C, H, W)
    assert jnp.allclose(out_fused, ref, atol=1e-5, rtol=1e-5), "fused mismatch"

    # Two-pass tiled path (pool-accumulate over HW tiles + tiled scale),
    # exercised explicitly with 128-wide lane tiles to validate the fallback.
    out_tiled = se_layer(x, w1, w2, force_two_pass=True, hw_tile=128)
    jax.block_until_ready(out_tiled)
    assert jnp.allclose(out_tiled, ref, atol=1e-5, rtol=1e-5), "tiled mismatch"

    print("KERNEL_OK")
</pallas_src>

<mosaic_0001>
module attributes {stable_mosaic.version = 11 : i64} {
  func.func @_fused_se_kernel(%arg0: i32, %arg1: memref<1x32x256xf32, #tpu.memory_space<vmem>>, %arg2: memref<32x2xf32, #tpu.memory_space<vmem>>, %arg3: memref<32x2xf32, #tpu.memory_space<vmem>>, %arg4: memref<1x32x256xf32, #tpu.memory_space<vmem>>) attributes {dimension_semantics = [#tpu.dimension_semantics<parallel>], iteration_bounds = array<i64: 2>, scalar_prefetch = 0 : i64, scratch_operands = 0 : i64, tpu.core_type = #tpu.core_type<tc>, window_params = [{transform_indices = @transform_0, window_bounds = array<i64: 1, 32, 256>}, {pipeline_mode = #tpu.pipeline_mode<synchronous>, transform_indices = @transform_1, window_bounds = array<i64: 32, 2>}, {pipeline_mode = #tpu.pipeline_mode<synchronous>, transform_indices = @transform_2, window_bounds = array<i64: 32, 2>}, {transform_indices = @transform_3, window_bounds = array<i64: 1, 32, 256>}]} {
    %c0 = arith.constant 0 : index
    %c0_0 = arith.constant 0 : index
    %c0_1 = arith.constant 0 : index
    %0 = vector.load %arg1[%c0, %c0_0, %c0_1] : memref<1x32x256xf32, #tpu.memory_space<vmem>>, vector<1x32x256xf32>
    %1 = vector.shape_cast %0 : vector<1x32x256xf32> to vector<32x256xf32>
    %cst = arith.constant dense<0.000000e+00> : vector<32xf32>
    %2 = vector.multi_reduction <add>, %1, %cst [1] : vector<32x256xf32> to vector<32xf32>
    %3 = vector.shape_cast %2 : vector<32xf32> to vector<32x1xf32>
    %cst_2 = arith.constant 3.906250e-03 : f32
    %4 = vector.broadcast %cst_2 : f32 to vector<32x1xf32>
    %5 = arith.mulf %3, %4 : vector<32x1xf32>
    %c0_3 = arith.constant 0 : index
    %c0_4 = arith.constant 0 : index
    %6 = vector.load %arg2[%c0_3, %c0_4] : memref<32x2xf32, #tpu.memory_space<vmem>>, vector<32x2xf32>
    %c0_5 = arith.constant 0 : index
    %c0_6 = arith.constant 0 : index
    %7 = vector.load %arg3[%c0_5, %c0_6] : memref<32x2xf32, #tpu.memory_space<vmem>>, vector<32x2xf32>
    %8 = vector.broadcast %5 : vector<32x1xf32> to vector<32x2xf32>
    %9 = arith.mulf %6, %8 : vector<32x2xf32>
    %cst_7 = arith.constant dense<0.000000e+00> : vector<2xf32>
    %10 = vector.multi_reduction <add>, %9, %cst_7 [0] : vector<32x2xf32> to vector<2xf32>
    %11 = vector.shape_cast %10 : vector<2xf32> to vector<1x2xf32>
    %cst_8 = arith.constant 0.000000e+00 : f32
    %12 = vector.broadcast %cst_8 : f32 to vector<1x2xf32>
    %13 = arith.maximumf %11, %12 : vector<1x2xf32>
    %14 = vector.broadcast %13 : vector<1x2xf32> to vector<32x2xf32>
    %15 = arith.mulf %7, %14 : vector<32x2xf32>
    %cst_9 = arith.constant dense<0.000000e+00> : vector<32xf32>
    %16 = vector.multi_reduction <add>, %15, %cst_9 [1] : vector<32x2xf32> to vector<32xf32>
    %17 = vector.shape_cast %16 : vector<32xf32> to vector<32x1xf32>
    %18 = arith.negf %17 : vector<32x1xf32>
    %19 = math.exp %18 : vector<32x1xf32>
    %cst_10 = arith.constant 1.000000e+00 : f32
    %20 = vector.broadcast %cst_10 : f32 to vector<32x1xf32>
    %21 = arith.addf %20, %19 : vector<32x1xf32>
    %22 = arith.divf %20, %21 : vector<32x1xf32>
    %c0_11 = arith.constant 0 : index
    %c0_12 = arith.constant 0 : index
    %c0_13 = arith.constant 0 : index
    %23 = vector.load %arg1[%c0_11, %c0_12, %c0_13] : memref<1x32x256xf32, #tpu.memory_space<vmem>>, vector<1x32x256xf32>
    %24 = vector.shape_cast %22 : vector<32x1xf32> to vector<1x32x1xf32>
    %25 = vector.broadcast %24 : vector<1x32x1xf32> to vector<1x32x256xf32>
    %26 = arith.mulf %23, %25 : vector<1x32x256xf32>
    %c0_14 = arith.constant 0 : index
    %c0_15 = arith.constant 0 : index
    %c0_16 = arith.constant 0 : index
    %27 = vector.load %arg4[%c0_14, %c0_15, %c0_16] : memref<1x32x256xf32, #tpu.memory_space<vmem>>, vector<1x32x256xf32>
    tpu.vector_store %arg4[%c0_14, %c0_15, %c0_16], %26 {strides = array<i32>} : memref<1x32x256xf32, #tpu.memory_space<vmem>>, vector<1x32x256xf32>,
    return
  }
  func.func @transform_0(%arg0: i32) -> (i32, i32, i32) {
    %c0_i32 = arith.constant 0 : i32
    %c0_i32_0 = arith.constant 0 : i32
    %c0_i32_1 = arith.constant 0 : i32
    return %arg0, %c0_i32, %c0_i32_0 : i32, i32, i32
  }
  func.func @transform_1(%arg0: i32) -> (i32, i32) {
    %c0_i32 = arith.constant 0 : i32
    %c0_i32_0 = arith.constant 0 : i32
    %c0_i32_1 = arith.constant 0 : i32
    return %c0_i32, %c0_i32_0 : i32, i32
  }
  func.func @transform_2(%arg0: i32) -> (i32, i32) {
    %c0_i32 = arith.constant 0 : i32
    %c0_i32_0 = arith.constant 0 : i32
    %c0_i32_1 = arith.constant 0 : i32
    return %c0_i32, %c0_i32_0 : i32, i32
  }
  func.func @transform_3(%arg0: i32) -> (i32, i32, i32) {
    %c0_i32 = arith.constant 0 : i32
    %c0_i32_0 = arith.constant 0 : i32
    %c0_i32_1 = arith.constant 0 : i32
    return %arg0, %c0_i32, %c0_i32_0 : i32, i32, i32
  }
}

</mosaic_0001>

<llo_original>
// kernel: tpu_custom_call.1
$region0: #{tpu_custom_call.1}
  #allocation0 [shape = 'u32[]', space=smem, size = 0x4, offset = 0x4, fixed_abs, tag = 'smem constant byte address 0x4 - core index']
  #allocation1 [shape = 'u32[72,128]{1,0:T(1,128)}', space=vmem, size = 0x9000, scoped, tag = 'internal scratch']
  %s0 = inlined_call_operand.hbm [shape: f32[2,32,256], index: 0, kind: input, shape index: {}]
  %s1 = inlined_call_operand.vmem [shape: f32[32,2], index: 1, kind: input, shape index: {}]
  %s2 = inlined_call_operand.vmem [shape: f32[32,2], index: 2, kind: input, shape index: {}]
  %s3 = inlined_call_operand.hbm [shape: f32[2,32,256], index: 3, kind: output, shape index: {}]
  %s4 = sld [smem:[#allocation0]]
  $region49: #{tpu_custom_call.1} parent=0
    _
  %s6 = ssub.s32 1, %s4
  %s7 = scalar_select 0, %s6, %s4
  $region1: #{tpu_custom_call.1} parent=0
    #allocation2 [shape = 'u8[65536]{0}', space=vmem, size = 0x10000, scoped, tag = 'input window, operand 0']
    #allocation3 [shape = 's32[2]{0}', space=sflag, size = 0x8, scoped, tag = 'scoped memory for tpu_custom_call.1']
    #allocation4 [shape = 's32[2]{0}', space=sflag, size = 0x8, scoped, tag = 'scoped memory for tpu_custom_call.1']
    #allocation5 [shape = 'u8[65536]{0}', space=vmem, size = 0x10000, scoped, tag = 'output window, operand 0']
    %8 = vsyncpa [#allocation3], 0
    %s9 = scalar_lea.sflag [#allocation3], 1
    %10 = vsyncpa %s9, 0
    %11 = vsyncpa [#allocation4], 0
    %s12 = scalar_lea.sflag [#allocation4], 1
    %13 = vsyncpa %s12, 0
    loop: start=0, step=1, limit=4
    $region2: #{tpu_custom_call.1} parent=1 // loop_pre_header
      _
    $region3: #{tpu_custom_call.1} parent=1 // loop_header
      %s15 = sphi 0, %s19
      %p16 = scmp.ge.s32.totalorder %s15, 4
      %s25 = sphi 0, %s27
      %s28 = sphi 0, %s25
      %s29 = sphi 0, %s28
      %s45 = sphi 0, %s29
      %s49 = sphi 0, %s49
      %s51 = sphi 0, %s49
      %s52 = sphi 0, %s51
      %s66 = sphi 0, %s52
      %s70 = sphi 0, %s70
      %s72 = sphi 0, %s70
      %s73 = sphi 0, %s72
      %s87 = sphi 0, %s73
      %s93 = sphi 0, %s95
      %s96 = sphi 0, %s93
      %s97 = sphi 0, %s96
      %s113 = sphi 0, %s97
    $region4: #{tpu_custom_call.1} parent=1 // loop_header_branch
      %18 = sbr.rel (%p16) target = $region8
    $region5: #{tpu_custom_call.1} parent=1 // loop_body
      %s20 = ssub.s32 %s15, 1
      %s21 = ssub.s32 %s15, 2
      %s22 = sadd.s32 %s15, 1
      %s23 = ssub.s32 %s15, %s22
      %p24 = scmp.eq.s32.totalorder %s23, 0
      %s26 = sadd.s32 %s25, 1
      %s27 = scalar_select %p24, %s25, %s26
      %p30 = pneg %p24
      %p31 = scmp.eq.s32.totalorder %s15, 1
      %p32 = por %p30, %p31
      %p33 = scmp.ne.s32.totalorder %s25, %s28
      %p34 = scmp.eq.s32.totalorder %s15, 0
      %p35 = por %p33, %p34
      %p36 = scmp.ne.s32.totalorder %s25, %s28
      %p37 = scmp.eq.s32.totalorder %s20, 1
      %p38 = por %p36, %p37
      %p39 = scmp.ne.s32.totalorder %s28, %s29
      %p40 = scmp.eq.s32.totalorder %s20, 0
      %p41 = por %p39, %p40
      %p42 = scmp.ne.s32.totalorder %s28, %s29
      %p43 = scmp.eq.s32.totalorder %s21, 1
      %p44 = por %p42, %p43
      %p46 = scmp.ne.s32.totalorder %s29, %s45
      %p47 = scmp.eq.s32.totalorder %s21, 0
      %p48 = por %p46, %p47
      %s50 = sadd.s32 %s49, 1
      %p53 = scmp.eq.s32.totalorder %s15, 1
      %p54 = scmp.ne.s32.totalorder %s49, %s51
      %p55 = scmp.eq.s32.totalorder %s15, 0
      %p56 = por %p54, %p55
      %p57 = scmp.ne.s32.totalorder %s49, %s51
      %p58 = scmp.eq.s32.totalorder %s20, 1
      %p59 = por %p57, %p58
      %p60 = scmp.ne.s32.totalorder %s51, %s52
      %p61 = scmp.eq.s32.totalorder %s20, 0
      %p62 = por %p60, %p61
      %p63 = scmp.ne.s32.totalorder %s51, %s52
      %p64 = scmp.eq.s32.totalorder %s21, 1
      %p65 = por %p63, %p64
      %p67 = scmp.ne.s32.totalorder %s52, %s66
      %p68 = scmp.eq.s32.totalorder %s21, 0
      %p69 = por %p67, %p68
      %s71 = sadd.s32 %s70, 1
      %p74 = scmp.eq.s32.totalorder %s15, 1
      %p75 = scmp.ne.s32.totalorder %s70, %s72
      %p76 = scmp.eq.s32.totalorder %s15, 0
      %p77 = por %p75, %p76
      %p78 = scmp.ne.s32.totalorder %s70, %s72
      %p79 = scmp.eq.s32.totalorder %s20, 1
      %p80 = por %p78, %p79
      %p81 = scmp.ne.s32.totalorder %s72, %s73
      %p82 = scmp.eq.s32.totalorder %s20, 0
      %p83 = por %p81, %p82
      %p84 = scmp.ne.s32.totalorder %s72, %s73
      %p85 = scmp.eq.s32.totalorder %s21, 1
      %p86 = por %p84, %p85
      %p88 = scmp.ne.s32.totalorder %s73, %s87
      %p89 = scmp.eq.s32.totalorder %s21, 0
      %p90 = por %p88, %p89
      %s91 = ssub.s32 %s15, %s22
      %p92 = scmp.eq.s32.totalorder %s91, 0
      %s94 = sadd.s32 %s93, 1
      %s95 = scalar_select %p92, %s93, %s94
      %p98 = pneg %p92
      %p99 = scmp.eq.s32.totalorder %s15, 1
      %p100 = por %p98, %p99
      %p101 = scmp.ne.s32.totalorder %s93, %s96
      %p102 = scmp.eq.s32.totalorder %s15, 0
      %p103 = por %p101, %p102
      %p104 = scmp.ne.s32.totalorder %s93, %s96
      %p105 = scmp.eq.s32.totalorder %s20, 1
      %p106 = por %p104, %p105
      %p107 = scmp.ne.s32.totalorder %s96, %s97
      %p108 = scmp.eq.s32.totalorder %s20, 0
      %p109 = por %p107, %p108
      %p110 = scmp.ne.s32.totalorder %s96, %s97
      %p111 = scmp.eq.s32.totalorder %s21, 1
      %p112 = por %p110, %p111
      %p114 = scmp.ne.s32.totalorder %s97, %s113
      %p115 = scmp.eq.s32.totalorder %s21, 0
      %p116 = por %p114, %p115
      %p117 = scmp.le.s32.totalorder 1, %s15
      %p118 = scmp.lt.s32.totalorder %s15, 3
      %p119 = pnand %p117, %p118
      %p120 = pneg %p119
      // Predicated region
      $region9: #{tpu_custom_call.1} parent=5 // pred_check
        _
      $region10: #{tpu_custom_call.1} parent=5 // pred_check_branch
        %122 = sbr.rel (%p119) target = $region12
      $region11: #{tpu_custom_call.1} parent=5 // pred_region
        %s123 = ssub.s32 %s15, 1
        // Predicated region
        $region13: #{tpu_custom_call.1} parent=11 // pred_check
          %p124 = pneg %p62
        $region14: #{tpu_custom_call.1} parent=11 // pred_check_branch
          %126 = sbr.rel (%p124) target = $region16
        $region15: #{tpu_custom_call.1} parent=11 // pred_region
          _
        $region16: #{tpu_custom_call.1} parent=11 // pred_fallthru
          _
        // Predicated region
        $region17: #{tpu_custom_call.1} parent=11 // pred_check
          %p127 = pneg %p83
        $region18: #{tpu_custom_call.1} parent=11 // pred_check_branch
          %129 = sbr.rel (%p127) target = $region20
        $region19: #{tpu_custom_call.1} parent=11 // pred_region
          _
        $region20: #{tpu_custom_call.1} parent=11 // pred_fallthru
          _
      $region12: #{tpu_custom_call.1} parent=5 // pred_fallthru
        _
      %p130 = scmp.lt.s32.totalorder %s15, 2
      // Predicated region
      $region21: #{tpu_custom_call.1} parent=5 // pred_check
        %p131 = pneg %p130
      $region22: #{tpu_custom_call.1} parent=5 // pred_check_branch
        %133 = sbr.rel (%p131) target = $region24
      $region23: #{tpu_custom_call.1} parent=5 // pred_region
        // Predicated region
        $region25: #{tpu_custom_call.1} parent=23 // pred_check
          %p134 = pneg %p35
        $region26: #{tpu_custom_call.1} parent=23 // pred_check_branch
          %136 = sbr.rel (%p134) target = $region28
        $region27: #{tpu_custom_call.1} parent=23 // pred_region
          %s137 = sand.u32 %s25, 1
          %s138 = scalar_lea.sflag [#allocation3], %s137
          %s139 = sand.u32 %s25, 1
          %s140 = smul.addr %s139, 64
          %s141 = scalar_lea.vmem [#allocation2], %s140
          %143 = vsyncadd %s138, 0
          %s144 = smul.addr %s15, 8
          %s145 = smul.addr %s144, 8
          %s146 = scalar_lea.hbm %s0, %s145
          %s147 = sshll.u32 %s146, 4
          %s148 = int_to_ptr.hbm [resolvable:$true] %s147
          %s149 = sshll.u32 %s141, 4
          %s150 = int_to_ptr.vmem [resolvable:$true] %s149
          %155 = dma.hbm_to_vmem [thread:$0]  %s148, 1024, %s150, %s138, 256, 256, 16
        $region28: #{tpu_custom_call.1} parent=23 // pred_fallthru
          _
      $region24: #{tpu_custom_call.1} parent=5 // pred_fallthru
        _
      %p156 = scmp.le.s32.totalorder 1, %s15
      %p157 = scmp.lt.s32.totalorder %s15, 3
      %p158 = pnand %p156, %p157
      %p159 = pneg %p158
      // Predicated region
      $region29: #{tpu_custom_call.1} parent=5 // pred_check
        _
      $region30: #{tpu_custom_call.1} parent=5 // pred_check_branch
        %161 = sbr.rel (%p158) target = $region32
      $region31: #{tpu_custom_call.1} parent=5 // pred_region
        %s162 = ssub.s32 %s15, 1
        %s163 = sand.u32 %s28, 1
        %s164 = scalar_lea.sflag [#allocation3], %s163
        %s165 = sand.u32 %s28, 1
        %s166 = smul.addr %s165, 64
        %s167 = scalar_lea.vmem [#allocation2], %s166
        // Predicated region
        $region33: #{tpu_custom_call.1} parent=31 // pred_check
          %p168 = pneg %p41
        $region34: #{tpu_custom_call.1} parent=31 // pred_check_branch
          %170 = sbr.rel (%p168) target = $region36
        $region35: #{tpu_custom_call.1} parent=31 // pred_region
          %172 = dma.done %s164, 1024
        $region36: #{tpu_custom_call.1} parent=31 // pred_fallthru
          _
        %s173 = sand.u32 %s28, 1
        %s174 = scalar_lea.sflag [#allocation3], %s173
        %s175 = sand.u32 %s28, 1
        %s176 = smul.addr %s175, 64
        %s177 = scalar_lea.vmem [#allocation2], %s176
        %p178 = pneg %p41
        %p179 = pneg %p38
        %p180 = pneg %p62
        %p181 = pneg %p59
        %p182 = pneg %p83
        %p183 = pneg %p80
        %p184 = pneg %p109
        %p185 = pneg %p106
        %s186 = sand.u32 %s96, 1
        %s187 = scalar_lea.sflag [#allocation4], %s186
        %s188 = sand.u32 %s96, 1
        %s189 = smul.addr %s188, 64
        %s190 = scalar_lea.vmem [#allocation5], %s189
        %v191 = vld [vmem:[%s167] sm:$0xff]
        %v192 = vld [vmem:[%s167 + $0x8] sm:$0xff]
        %v193 = vld [vmem:[%s167 + $0x10] sm:$0xff]
        %v194 = vld [vmem:[%s167 + $0x18] sm:$0xff]
        %v195 = vld [vmem:[%s167 + $0x20] sm:$0xff]
        %v196 = vld [vmem:[%s167 + $0x28] sm:$0xff]
        %v197 = vld [vmem:[%s167 + $0x30] sm:$0xff]
        %v198 = vld [vmem:[%s167 + $0x38] sm:$0xff]
        %v199 = vadd.f32 %v191, %v192
        %200 = vadd.xlane.f32.xlu0 %v199
        %v201 = vpop.xlane.xlu0 %200
        %v202 = vadd.f32 %v193, %v194
        %203 = vadd.xlane.f32.xlu0 %v202
        %v204 = vpop.xlane.xlu0 %203
        %v205 = vadd.f32 %v195, %v196
        %206 = vadd.xlane.f32.xlu0 %v205
        %v207 = vpop.xlane.xlu0 %206
        %v208 = vadd.f32 %v197, %v198
        %209 = vadd.xlane.f32.xlu0 %v208
        %v210 = vpop.xlane.xlu0 %209
        %v211 = vmul.f32 %v201, 0.00390625
        %v212 = vmul.f32 %v204, 0.00390625
        %v213 = vmul.f32 %v207, 0.00390625
        %v214 = vmul.f32 %v210, 0.00390625
        %v215 = vld [vmem:[%s1] sm:$0xff]
        %v216 = vld [vmem:[%s1 + $0x8] sm:$0xff]
        %v217 = vld [vmem:[%s1 + $0x10] sm:$0xff]
        %v218 = vld [vmem:[%s1 + $0x18] sm:$0xff]
        %v219 = vld [vmem:[%s2] sm:$0xff]
        %v220 = vld [vmem:[%s2 + $0x8] sm:$0xff]
        %v221 = vld [vmem:[%s2 + $0x10] sm:$0xff]
        %v222 = vld [vmem:[%s2 + $0x18] sm:$0xff]
        %v223 = vmul.f32 %v215, %v211
        %v224 = vmul.f32 %v216, %v212
        %v225 = vmul.f32 %v217, %v213
        %v226 = vmul.f32 %v218, %v214
        %vm227 = vcmask 15360
        %v228 = vsel %vm227, %v223, 0.0
        %v229 = vsel %vm227, %v224, 0.0
        %v230 = vadd.f32 %v228, %v229
        %v231 = vsel %vm227, %v225, 0.0
        %v232 = vadd.f32 %v230, %v231
        %v233 = vsel %vm227, %v226, 0.0
        %v234 = vadd.f32 %v232, %v233
        %v235 = vrot.slane %v234, 4
        %v236 = vadd.f32 %v234, %v235
        %v237 = vrot.slane %v236, 2
        %v238 = vadd.f32 %v236, %v237
        %v239 = vrot.slane %v238, 1
        %v240 = vadd.f32 %v238, %v239
        %v241 = vmax.f32 %v240, 0.0
        %v242 = vmul.f32 %v219, %v241
        %v243 = vmul.f32 %v220, %v241
        %v244 = vmul.f32 %v221, %v241
        %v245 = vmul.f32 %v222, %v241
        %v246 = vsel %vm227, %v242, 0.0
        %247 = vadd.xlane.f32.xlu0 %v246
        %v248 = vpop.xlane.xlu0 %247
        %v249 = vsel %vm227, %v243, 0.0
        %250 = vadd.xlane.f32.xlu0 %v249
        %v251 = vpop.xlane.xlu0 %250
        %v252 = vsel %vm227, %v244, 0.0
        %253 = vadd.xlane.f32.xlu0 %v252
        %v254 = vpop.xlane.xlu0 %253
        %v255 = vsel %vm227, %v245, 0.0
        %256 = vadd.xlane.f32.xlu0 %v255
        %v257 = vpop.xlane.xlu0 %256
        %v258 = vxor.u32 %v248, 2147483648
        %v259 = vxor.u32 %v251, 2147483648
        %v260 = vxor.u32 %v254, 2147483648
        %v261 = vxor.u32 %v257, 2147483648
        %v262 = vmul.f32 %v258, 1.442695
        %v263 = vpow.pop %v262
        %v264 = vmul.f32 %v259, 1.442695
        %v265 = vpow.pop %v264
        %v266 = vmul.f32 %v260, 1.442695
        %v267 = vpow.pop %v266
        %v268 = vmul.f32 %v261, 1.442695
        %v269 = vpow.pop %v268
        %v270 = vadd.f32 %v263, 1.0
        %v271 = vadd.f32 %v265, 1.0
        %v272 = vadd.f32 %v267, 1.0
        %v273 = vadd.f32 %v269, 1.0
        %v274 = vrcp.pop %v270
        %v275 = vmul.f32 %v270, %v274
        %v276 = vsub.f32 1.0, %v275
        %v277 = vmul.f32 %v274, %v276
        %v278 = vadd.f32 %v274, %v277
        %vm279 = vweird.f32 %v270
        %vm280 = vweird.f32 %v274
        %vm281 = vmor %vm279, %vm280
        %v282 = vsel %vm281, %v274, %v278
        %v283 = vand.u32 2147483647, %v270
        %vm284 = vcmp.eq.f32.partialorder %v283, 8.507059e+37
        %v285 = vand.u32 %v270, 2147483648
        %v286 = vor.u32 1.1754944e-38, %v285
        %v287 = vsel %vm284, %v286, %v282
        %v288 = vmul.f32 1.0, %v287
        %v289 = vrcp.pop %v271
        %v290 = vmul.f32 %v271, %v289
        %v291 = vsub.f32 1.0, %v290
        %v292 = vmul.f32 %v289, %v291
        %v293 = vadd.f32 %v289, %v292
        %vm294 = vweird.f32 %v271
        %vm295 = vweird.f32 %v289
        %vm296 = vmor %vm294, %vm295
        %v297 = vsel %vm296, %v289, %v293
        %v298 = vand.u32 2147483647, %v271
        %vm299 = vcmp.eq.f32.partialorder %v298, 8.507059e+37
        %v300 = vand.u32 %v271, 2147483648
        %v301 = vor.u32 1.1754944e-38, %v300
        %v302 = vsel %vm299, %v301, %v297
        %v303 = vmul.f32 1.0, %v302
        %v304 = vrcp.pop %v272
        %v305 = vmul.f32 %v272, %v304
        %v306 = vsub.f32 1.0, %v305
        %v307 = vmul.f32 %v304, %v306
        %v308 = vadd.f32 %v304, %v307
        %vm309 = vweird.f32 %v272
        %vm310 = vweird.f32 %v304
        %vm311 = vmor %vm309, %vm310
        %v312 = vsel %vm311, %v304, %v308
        %v313 = vand.u32 2147483647, %v272
        %vm314 = vcmp.eq.f32.partialorder %v313, 8.507059e+37
        %v315 = vand.u32 %v272, 2147483648
        %v316 = vor.u32 1.1754944e-38, %v315
        %v317 = vsel %vm314, %v316, %v312
        %v318 = vmul.f32 1.0, %v317
        %v319 = vrcp.pop %v273
        %v320 = vmul.f32 %v273, %v319
        %v321 = vsub.f32 1.0, %v320
        %v322 = vmul.f32 %v319, %v321
        %v323 = vadd.f32 %v319, %v322
        %vm324 = vweird.f32 %v273
        %vm325 = vweird.f32 %v319
        %vm326 = vmor %vm324, %vm325
        %v327 = vsel %vm326, %v319, %v323
        %v328 = vand.u32 2147483647, %v273
        %vm329 = vcmp.eq.f32.partialorder %v328, 8.507059e+37
        %v330 = vand.u32 %v273, 2147483648
        %v331 = vor.u32 1.1754944e-38, %v330
        %v332 = vsel %vm329, %v331, %v327
        %v333 = vmul.f32 1.0, %v332
        %v334 = vmul.f32 %v191, %v288
        %v335 = vmul.f32 %v192, %v288
        %v336 = vmul.f32 %v193, %v303
        %v337 = vmul.f32 %v194, %v303
        %v338 = vmul.f32 %v195, %v318
        %v339 = vmul.f32 %v196, %v318
        %v340 = vmul.f32 %v197, %v333
        %v341 = vmul.f32 %v198, %v333
        %342 = vst [vmem:[%s190] sm:$0xff] %v334
        %343 = vst [vmem:[%s190 + $0x8] sm:$0xff] %v335
        %344 = vst [vmem:[%s190 + $0x10] sm:$0xff] %v336
        %345 = vst [vmem:[%s190 + $0x18] sm:$0xff] %v337
        %346 = vst [vmem:[%s190 + $0x20] sm:$0xff] %v338
        %347 = vst [vmem:[%s190 + $0x28] sm:$0xff] %v339
        %348 = vst [vmem:[%s190 + $0x30] sm:$0xff] %v340
        %349 = vst [vmem:[%s190 + $0x38] sm:$0xff] %v341
        %s350 = sand.u32 %s96, 1
        %s351 = scalar_lea.sflag [#allocation4], %s350
        %s352 = sand.u32 %s96, 1
        %s353 = smul.addr %s352, 64
        %s354 = scalar_lea.vmem [#allocation5], %s353
        // Predicated region
        $region37: #{tpu_custom_call.1} parent=31 // pred_check
          %p355 = pneg %p106
        $region38: #{tpu_custom_call.1} parent=31 // pred_check_branch
          %357 = sbr.rel (%p355) target = $region40
        $region39: #{tpu_custom_call.1} parent=31 // pred_region
          %359 = vsyncadd %s351, 0
          %s360 = smul.addr %s20, 8
          %s361 = smul.addr %s360, 8
          %s362 = scalar_lea.hbm %s3, %s361
          %s363 = sshll.u32 %s354, 4
          %s364 = int_to_ptr.vmem [resolvable:$true] %s363
          %s365 = sshll.u32 %s362, 4
          %s366 = int_to_ptr.hbm [resolvable:$true] %s365
          %371 = dma.vmem_to_hbm [thread:$0]  %s364, 1024, %s366, %s351, 256, 256, 16
        $region40: #{tpu_custom_call.1} parent=31 // pred_fallthru
          _
      $region32: #{tpu_custom_call.1} parent=5 // pred_fallthru
        _
      %p372 = scmp.le.s32.totalorder 2, %s15
      // Predicated region
      $region41: #{tpu_custom_call.1} parent=5 // pred_check
        %p373 = pneg %p372
      $region42: #{tpu_custom_call.1} parent=5 // pred_check_branch
        %375 = sbr.rel (%p373) target = $region44
      $region43: #{tpu_custom_call.1} parent=5 // pred_region
        %s376 = ssub.s32 %s15, 2
        // Predicated region
        $region45: #{tpu_custom_call.1} parent=43 // pred_check
          %p377 = pneg %p112
        $region46: #{tpu_custom_call.1} parent=43 // pred_check_branch
          %379 = sbr.rel (%p377) target = $region48
        $region47: #{tpu_custom_call.1} parent=43 // pred_region
          %s380 = sand.u32 %s97, 1
          %s381 = scalar_lea.sflag [#allocation4], %s380
          %s382 = sand.u32 %s97, 1
          %s383 = smul.addr %s382, 64
          %s384 = scalar_lea.vmem [#allocation5], %s383
          %386 = dma.done %s381, 1024
        $region48: #{tpu_custom_call.1} parent=43 // pred_fallthru
          _
      $region44: #{tpu_custom_call.1} parent=5 // pred_fallthru
        _
    $region6: #{tpu_custom_call.1} parent=1 // loop_footer
      %s19 = sadd.s32 1, %s15
    $region7: #{tpu_custom_call.1} parent=1 // loop_footer_branch
      %14 = sbr.rel target = $region3
    $region8: #{tpu_custom_call.1} parent=1 // loop_exit
      _
    %387 = vsyncpa [#allocation3], 1
    %s388 = scalar_lea.sflag [#allocation3], 1
    %389 = vsyncpa %s388, 1
    %390 = vsyncpa [#allocation4], 1
    %s391 = scalar_lea.sflag [#allocation4], 1
    %392 = vsyncpa %s391, 1

</llo_original>
